<compile_context>
chip_gen: v5e
topology: v5e:2x2
jax: 0.10.0
libtpu: 0.0.40
codegen_flags: <defaults>
</compile_context>

<pallas_src>
import functools

import jax
import jax.numpy as jnp
from jax.experimental import pallas as pl
from jax.experimental.pallas import tpu as pltpu

LANE = 128
MAX_TM = 1024  # 1024 x 128 f32 block = 512 KiB; stays well under scoped VMEM everywhere


def _drop_path_kernel(x_ref, u_ref, o_ref, *, drop_prob):
    x = x_ref[...]
    # floor(keep_prob + u) == 1  <=>  u >= drop_prob   (u in [0, 1))
    keep = u_ref[...] >= jnp.float32(drop_prob)
    inv_keep = jnp.asarray(1.0 / (1.0 - drop_prob), dtype=x.dtype)
    o_ref[...] = jnp.where(keep, x * inv_keep, jnp.zeros_like(x))


def drop_path(x, drop_prob: float, seed: int, training: bool = True):
    """Pallas implementation of DropPath.forward semantics (per-element mask)."""
    # Eval path / no-drop path: identity, exactly as in the PyTorch module.
    if drop_prob == 0.0 or not training:
        return x

    orig_shape = x.shape
    orig_dtype = x.dtype

    flat = x.reshape(-1)
    n = flat.shape[0]
    pad = (-n) % LANE
    if pad:
        # Only pay the pad/slice HBM round trip when the lane reshape needs it.
        flat = jnp.pad(flat, (0, pad))
    M = flat.shape[0] // LANE
    x2 = flat.reshape(M, LANE)

    # Per-element uniforms generated outside the kernel (tiling-independent stream).
    # pltpu.prng_seed/prng_random_bits have no CPU/interpret lowering, so the
    # hardware PRNG cannot be used portably here.
    u2 = jax.random.uniform(jax.random.PRNGKey(seed), (M, LANE), dtype=jnp.float32)

    # Block rows: full extent for small inputs (always a legal block), else a
    # large multiple-of-8 tile; Pallas masks the ragged last block automatically.
    tm = M if M <= MAX_TM else MAX_TM
    grid = (pl.cdiv(M, tm),)

    out2 = pl.pallas_call(
        functools.partial(_drop_path_kernel, drop_prob=float(drop_prob)),
        out_shape=jax.ShapeDtypeStruct((M, LANE), orig_dtype),
        grid=grid,
        in_specs=[
            pl.BlockSpec((tm, LANE), lambda i: (i, 0)),  # x
            pl.BlockSpec((tm, LANE), lambda i: (i, 0)),  # uniforms
        ],
        out_specs=pl.BlockSpec((tm, LANE), lambda i: (i, 0)),
        compiler_params=pltpu.CompilerParams(
            dimension_semantics=("parallel",),  # no cross-block state -> megacore OK
        ),
    )(x2, u2)

    out_flat = out2.reshape(-1)
    if pad:
        out_flat = out_flat[:n]
    return out_flat.reshape(orig_shape)


if __name__ == "__main__":
    key = jax.random.PRNGKey(0)
    # Small NCHW input consistent with a backbone feature map.
    x = jax.random.normal(key, (2, 4, 16, 16), dtype=jnp.float32)

    drop_prob = 0.2
    keep_prob = 1.0 - drop_prob

    # Training path: per-element stochastic mask + rescale.
    y_train = jax.block_until_ready(drop_path(x, drop_prob, seed=1234, training=True))

    # Eval path: identity.
    y_eval = jax.block_until_ready(drop_path(x, drop_prob, seed=1234, training=False))

    # Sanity checks: eval is identity; train output is either 0 or x/keep_prob.
    assert y_train.shape == x.shape and y_train.dtype == x.dtype
    assert jnp.allclose(y_eval, x)
    scaled = x / keep_prob
    ok = jnp.all(
        jnp.isclose(y_train, 0.0, atol=1e-6)
        | jnp.isclose(y_train, scaled, rtol=1e-5, atol=1e-6)
    )
    assert bool(ok), "outputs must be 0 or x/keep_prob elementwise"
    # Mask should be neither all-zeros nor all-ones for drop_prob=0.2 on 2048 elems.
    kept_frac = float(jnp.mean((jnp.abs(y_train) > 0).astype(jnp.float32)))
    assert 0.5 < kept_frac < 1.0

    print("KERNEL_OK")
</pallas_src>

<mosaic_0001>
module attributes {stable_mosaic.version = 11 : i64} {
  func.func @_drop_path_kernel(%arg0: i32, %arg1: memref<16x128xf32, #tpu.memory_space<vmem>>, %arg2: memref<16x128xf32, #tpu.memory_space<vmem>>, %arg3: memref<16x128xf32, #tpu.memory_space<vmem>>) attributes {dimension_semantics = [#tpu.dimension_semantics<parallel>], iteration_bounds = array<i64: 1>, scalar_prefetch = 0 : i64, scratch_operands = 0 : i64, tpu.core_type = #tpu.core_type<tc>, window_params = [{transform_indices = @transform_0, window_bounds = array<i64: 16, 128>}, {transform_indices = @transform_1, window_bounds = array<i64: 16, 128>}, {transform_indices = @transform_2, window_bounds = array<i64: 16, 128>}]} {
    %c0 = arith.constant 0 : index
    %c0_0 = arith.constant 0 : index
    %0 = vector.load %arg1[%c0, %c0_0] : memref<16x128xf32, #tpu.memory_space<vmem>>, vector<16x128xf32>
    %c0_1 = arith.constant 0 : index
    %c0_2 = arith.constant 0 : index
    %1 = vector.load %arg2[%c0_1, %c0_2] : memref<16x128xf32, #tpu.memory_space<vmem>>, vector<16x128xf32>
    %cst = arith.constant 2.000000e-01 : f32
    %2 = vector.broadcast %cst : f32 to vector<16x128xf32>
    %3 = arith.cmpf oge, %1, %2 : vector<16x128xf32>
    %cst_3 = arith.constant 1.250000e+00 : f32
    %4 = vector.broadcast %cst_3 : f32 to vector<16x128xf32>
    %5 = arith.mulf %0, %4 : vector<16x128xf32>
    %cst_4 = arith.constant 0.000000e+00 : f32
    %6 = vector.broadcast %cst_4 : f32 to vector<16x128xf32>
    %7 = arith.select %3, %5, %6 : vector<16x128xi1>, vector<16x128xf32>
    %c0_5 = arith.constant 0 : index
    %c0_6 = arith.constant 0 : index
    %8 = vector.load %arg3[%c0_5, %c0_6] : memref<16x128xf32, #tpu.memory_space<vmem>>, vector<16x128xf32>
    tpu.vector_store %arg3[%c0_5, %c0_6], %7 {strides = array<i32>} : memref<16x128xf32, #tpu.memory_space<vmem>>, vector<16x128xf32>,
    return
  }
  func.func @transform_0(%arg0: i32) -> (i32, i32) {
    %c0_i32 = arith.constant 0 : i32
    %c0_i32_0 = arith.constant 0 : i32
    return %arg0, %c0_i32 : i32, i32
  }
  func.func @transform_1(%arg0: i32) -> (i32, i32) {
    %c0_i32 = arith.constant 0 : i32
    %c0_i32_0 = arith.constant 0 : i32
    return %arg0, %c0_i32 : i32, i32
  }
  func.func @transform_2(%arg0: i32) -> (i32, i32) {
    %c0_i32 = arith.constant 0 : i32
    %c0_i32_0 = arith.constant 0 : i32
    return %arg0, %c0_i32 : i32, i32
  }
}

</mosaic_0001>

<llo_original>
// kernel: tpu_custom_call.1
$region0: #{tpu_custom_call.1}
  #allocation0 [shape = 'u32[]', space=smem, size = 0x4, offset = 0x4, fixed_abs, tag = 'smem constant byte address 0x4 - core index']
  #allocation1 [shape = 'u32[72,128]{1,0:T(1,128)}', space=vmem, size = 0x9000, scoped, tag = 'internal scratch']
  %s0 = inlined_call_operand.hbm [shape: f32[16,128], index: 0, kind: input, shape index: {}]
  %s1 = inlined_call_operand.hbm [shape: f32[16,128], index: 1, kind: input, shape index: {}]
  %s2 = inlined_call_operand.hbm [shape: f32[16,128], index: 2, kind: output, shape index: {}]
  %s3 = sld [smem:[#allocation0]]
  $region26: #{tpu_custom_call.1} parent=0
    _
  %s5 = ssub.s32 1, %s3
  %s6 = scalar_select 0, %s5, %s3
  $region1: #{tpu_custom_call.1} parent=0
    #allocation2 [shape = 'u8[8192]{0}', space=vmem, size = 0x2000, scoped, tag = 'input window, operand 0, single buffered']
    #allocation3 [shape = 's32[1]{0}', space=sflag, size = 0x4, scoped, tag = 'scoped memory for tpu_custom_call.1']
    #allocation4 [shape = 's32[1]{0}', space=sflag, size = 0x4, scoped, tag = 'scoped memory for tpu_custom_call.1']
    #allocation5 [shape = 'u8[8192]{0}', space=vmem, size = 0x2000, scoped, tag = 'input window, operand 1, single buffered']
    #allocation6 [shape = 's32[1]{0}', space=sflag, size = 0x4, scoped, tag = 'scoped memory for tpu_custom_call.1']
    #allocation7 [shape = 'u8[8192]{0}', space=vmem, size = 0x2000, scoped, tag = 'output window, operand 0, single buffered']
    %7 = vsyncpa [#allocation3], 0
    %8 = vsyncpa [#allocation6], 0
    %9 = vsyncpa [#allocation4], 0
    // Predicated region
    $region2: #{tpu_custom_call.1} parent=1 // pred_check
      _
    $region3: #{tpu_custom_call.1} parent=1 // pred_check_branch
      %11 = sbr.rel (0) target = $region5
    $region4: #{tpu_custom_call.1} parent=1 // pred_region
      %13 = vsyncadd [#allocation3], 0
      %s14 = sshll.u32 %s0, 4
      %s15 = int_to_ptr.hbm [resolvable:$true] %s14
      %s16 = sshll.u32 [#allocation2], 4
      %s17 = int_to_ptr.vmem [resolvable:$true] %s16
      %22 = dma.hbm_to_vmem [thread:$0]  %s15, 256, %s17, [#allocation3], 128, 128, 8
    $region5: #{tpu_custom_call.1} parent=1 // pred_fallthru
      _
    // Predicated region
    $region6: #{tpu_custom_call.1} parent=1 // pred_check
      _
    $region7: #{tpu_custom_call.1} parent=1 // pred_check_branch
      %24 = sbr.rel (0) target = $region9
    $region8: #{tpu_custom_call.1} parent=1 // pred_region
      %26 = vsyncadd [#allocation6], 0
      %s27 = sshll.u32 %s1, 4
      %s28 = int_to_ptr.hbm [resolvable:$true] %s27
      %s29 = sshll.u32 [#allocation5], 4
      %s30 = int_to_ptr.vmem [resolvable:$true] %s29
      %35 = dma.hbm_to_vmem [thread:$0]  %s28, 256, %s30, [#allocation6], 128, 128, 8
    $region9: #{tpu_custom_call.1} parent=1 // pred_fallthru
      _
    // Predicated region
    $region10: #{tpu_custom_call.1} parent=1 // pred_check
      _
    $region11: #{tpu_custom_call.1} parent=1 // pred_check_branch
      %37 = sbr.rel (0) target = $region13
    $region12: #{tpu_custom_call.1} parent=1 // pred_region
      %39 = dma.done [#allocation3], 256
    $region13: #{tpu_custom_call.1} parent=1 // pred_fallthru
      _
    // Predicated region
    $region14: #{tpu_custom_call.1} parent=1 // pred_check
      _
    $region15: #{tpu_custom_call.1} parent=1 // pred_check_branch
      %41 = sbr.rel (0) target = $region17
    $region16: #{tpu_custom_call.1} parent=1 // pred_region
      %43 = dma.done [#allocation6], 256
    $region17: #{tpu_custom_call.1} parent=1 // pred_fallthru
      _
    %v44 = vld [vmem:[#allocation2] sm:$0xff]
    %v45 = vld [vmem:[#allocation2 + $0x8] sm:$0xff]
    %v46 = vld [vmem:[#allocation5] sm:$0xff]
    %v47 = vld [vmem:[#allocation5 + $0x8] sm:$0xff]
    %vm48 = vcmp.ge.f32.partialorder %v46, 0.2
    %vm49 = vcmp.ge.f32.partialorder %v47, 0.2
    %v50 = vmul.f32 %v44, 1.25
    %v51 = vmul.f32 %v45, 1.25
    %v52 = vsel %vm48, %v50, 0.0
    %v53 = vsel %vm49, %v51, 0.0
    %54 = vst [vmem:[#allocation7] sm:$0xff] %v52
    %55 = vst [vmem:[#allocation7 + $0x8] sm:$0xff] %v53
    // Predicated region
    $region18: #{tpu_custom_call.1} parent=1 // pred_check
      _
    $region19: #{tpu_custom_call.1} parent=1 // pred_check_branch
      %57 = sbr.rel (0) target = $region21
    $region20: #{tpu_custom_call.1} parent=1 // pred_region
      %59 = vsyncadd [#allocation4], 0
      %s60 = sshll.u32 [#allocation7], 4
      %s61 = int_to_ptr.vmem [resolvable:$true] %s60
      %s62 = sshll.u32 %s2, 4
      %s63 = int_to_ptr.hbm [resolvable:$true] %s62
      %68 = dma.vmem_to_hbm [thread:$0]  %s61, 256, %s63, [#allocation4], 128, 128, 8
    $region21: #{tpu_custom_call.1} parent=1 // pred_fallthru
      _
    // Predicated region
    $region22: #{tpu_custom_call.1} parent=1 // pred_check
      _
    $region23: #{tpu_custom_call.1} parent=1 // pred_check_branch
      %70 = sbr.rel (0) target = $region25
    $region24: #{tpu_custom_call.1} parent=1 // pred_region
      %72 = dma.done [#allocation4], 256
    $region25: #{tpu_custom_call.1} parent=1 // pred_fallthru
      _
    %73 = vsyncpa [#allocation3], 1
    %74 = vsyncpa [#allocation6], 1
    %75 = vsyncpa [#allocation4], 1

</llo_original>
